<compile_context>
chip_gen: v6e
topology: v6e:2x2x1
jax: 0.10.0
libtpu: 0.0.40
codegen_flags: <defaults>
</compile_context>

<pallas_src>
import functools

import jax
import jax.numpy as jnp
from jax import lax
from jax.experimental import pallas as pl
from jax.experimental.pallas import tpu as pltpu

EPS = 1e-5  # nn.InstanceNorm2d default eps (affine=False, no running stats)


def _resblock_kernel(x_ref, w1_ref, w2_ref, o_ref, *, width):
    """One grid step: nb samples packed on sublanes as one (nb*C, H*W) slab.

    x_ref  : (nb*C, H*W)        f32, lane-dense input slab (VMEM)
    w*_ref : (nb*C, 9*nb*C)     MXU dtype, per-tap block-diag weights (VMEM)
    o_ref  : (nb*C, H*W)        f32, output slab (VMEM)
    """
    nbC, K = o_ref.shape
    W = width

    x = x_ref[...].astype(jnp.float32)

    # Lane-position masks, built in-kernel from iota (no captured constants).
    flat = lax.broadcasted_iota(jnp.int32, (1, K), 1)     # flat index i*W + j
    col = flat % W
    is_first = col == 0                 # j == 0
    is_last = col == W - 1              # j == W-1
    has_above = flat >= W               # row i-1 exists (i >= 1)
    has_below = flat < K - W            # row i+1 exists (i <= H-2)

    def make_taps(a):
        """9 shifted/padded views of the (nbC, K) slab, stacked on sublanes.

        PeriodicPad2d(1) semantics on the flat layout: pltpu.roll along the
        lane axis (XLU) for the shifts, a mask-select for the circular-W wrap
        column, a mask-select to zero the H halo rows.  One set of rolls/masks
        serves all nb samples (purely lane-positional)."""
        rolls = {0: a}

        def rolled(s):  # value at lane k is a[(k + s) mod K]
            r = (-s) % K
            if r not in rolls:
                rolls[r] = pltpu.roll(a, r, 1)
            return rolls[r]

        taps = []
        for dh in range(3):
            for dw in range(3):
                dr, dc = dh - 1, dw - 1
                s = dr * W + dc
                tap = rolled(s)
                if dc == 1:        # circular W: col W-1 wraps to col 0, same row
                    tap = jnp.where(is_last, rolled(s - W), tap)
                elif dc == -1:     # circular W: col 0 wraps to col W-1, same row
                    tap = jnp.where(is_first, rolled(s + W), tap)
                if dr == -1:       # zero pad above: row 0 has no row above
                    tap = jnp.where(has_above, tap, 0.0)
                elif dr == 1:      # zero pad below: row H-1 has no row below
                    tap = jnp.where(has_below, tap, 0.0)
                taps.append(tap)
        return jnp.concatenate(taps, axis=0)              # (9*nbC, K)

    def conv3x3(a, w):
        # Single GEMM: (nbC, 9*nbC) x (9*nbC, K) -> (nbC, K), f32 accumulation.
        t = make_taps(a)
        if t.dtype != w.dtype:
            t = t.astype(w.dtype)  # at most one cast per conv (bf16 MXU path)
        return jnp.dot(w, t, preferred_element_type=jnp.float32)

    def instance_norm(a):
        # Per-(sample, channel) = per-row; two-pass variance for stability.
        m = jnp.mean(a, axis=1, keepdims=True)
        d = a - m
        v = jnp.mean(d * d, axis=1, keepdims=True)
        return d * lax.rsqrt(v + EPS)

    w1 = w1_ref[...]
    w2 = w2_ref[...]
    # conv -> InstanceNorm -> ReLU  (conv bias folded: exactly cancelled by
    #                                the IN mean subtraction)
    y = jnp.maximum(instance_norm(conv3x3(x, w1)), 0.0)
    # TODO(synk): Dropout(0.5) is identity here (eval/inference); a training
    # variant would need a PRNG mask path.
    z = instance_norm(conv3x3(y, w2))
    o_ref[...] = (x + z).astype(o_ref.dtype)              # residual, lane-dense


def _pick_samples_per_block(N, C):
    """Largest divisor nb of N such that the (nb*C, K) block is sublane-legal
    ((nb*C) % 8 == 0, or the block covers the whole array) and nb*C <= 128
    (one MXU row tile). Prefer keeping >=2 grid steps (v7x dual TC) when each
    step still carries at least 64 sublanes of data."""
    cands = [d for d in range(1, N + 1)
             if N % d == 0 and d * C <= 128 and ((d * C) % 8 == 0 or d == N)]
    if not cands:
        cands = [N]
    nb = max(cands)
    if N // nb < 2:
        alt = [d for d in cands if N // d >= 2 and d * C >= 64]
        if alt:
            nb = max(alt)
    return nb


def _prep_weights(w, nb, C, dtype):
    """(C,C,3,3) OIHW -> (nb*C, 9*nb*C): per-tap weights, block-diagonal over
    the nb samples packed along sublanes, concatenated tap-major along the
    contraction axis (matching the kernel's tap stacking order)."""
    taps = jnp.transpose(w, (2, 3, 0, 1)).reshape(9, C, C)     # taps[t, o, i]
    eye = jnp.eye(nb, dtype=w.dtype)
    bd = eye[None, :, None, :, None] * taps[:, None, :, None, :]   # (9,nb,C,nb,C)
    bd = bd.reshape(9, nb * C, nb * C)
    wcat = jnp.transpose(bd, (1, 0, 2)).reshape(nb * C, 9 * nb * C)
    return wcat.astype(dtype)


@functools.partial(jax.jit, static_argnames=("samples_per_block", "mxu_dtype"))
def resblock_pallas(x, w1, b1, w2, b2, *, samples_per_block=None,
                    mxu_dtype=jnp.float32):
    """Fused ResBlock forward.

    b1/b2 are accepted for interface parity with the PyTorch module but are
    provably no-ops: InstanceNorm2d(affine=False) subtracts the per-(sample,
    channel) mean, which cancels a per-channel constant bias exactly and
    leaves the variance unchanged."""
    del b1, b2
    N, C, H, W = x.shape
    K = H * W
    nb = samples_per_block if samples_per_block is not None else \
        _pick_samples_per_block(N, C)
    assert N % nb == 0, "samples_per_block must divide the batch size"
    assert (nb * C) % 8 == 0 or nb == N, \
        "nb*C must be a multiple of 8 (sublane tile) or cover the whole batch"

    # Lane-dense activations: (N*C, K), sample-major on the sublane axis.
    x_flat = x.reshape(N * C, K).astype(jnp.float32)
    w1_cat = _prep_weights(w1, nb, C, mxu_dtype)
    w2_cat = _prep_weights(w2, nb, C, mxu_dtype)

    kernel = functools.partial(_resblock_kernel, width=W)
    grid_spec = pltpu.PrefetchScalarGridSpec(
        num_scalar_prefetch=0,
        grid=(N // nb,),
        in_specs=[
            pl.BlockSpec((nb * C, K), lambda n: (n, 0)),          # x slab
            pl.BlockSpec((nb * C, 9 * nb * C), lambda n: (0, 0)), # w1 (resident)
            pl.BlockSpec((nb * C, 9 * nb * C), lambda n: (0, 0)), # w2 (resident)
        ],
        out_specs=pl.BlockSpec((nb * C, K), lambda n: (n, 0)),
    )
    out = pl.pallas_call(
        kernel,
        out_shape=jax.ShapeDtypeStruct((N * C, K), jnp.float32),
        grid_spec=grid_spec,
        compiler_params=pltpu.CompilerParams(
            dimension_semantics=("parallel",),   # v7x: both TCs split the grid
            vmem_limit_bytes=32 * 1024 * 1024,
        ),
    )(x_flat, w1_cat, w2_cat)
    return out.reshape(N, C, H, W)


# ----------------------------- pure-JAX reference -----------------------------

def _periodic_pad(x, p=1):
    """PeriodicPad2d(1): circular along W, zero along H (NCHW)."""
    x = jnp.concatenate([x[..., -p:], x, x[..., :p]], axis=-1)
    return jnp.pad(x, ((0, 0), (0, 0), (p, p), (0, 0)))


def resblock_ref(x, w1, b1, w2, b2):
    """Mirrors the PyTorch module in eval mode (bias included, f32 conv)."""
    def conv(xp, w, b):
        y = lax.conv_general_dilated(
            xp, w, window_strides=(1, 1), padding="VALID",
            dimension_numbers=("NCHW", "OIHW", "NCHW"))
        return y + b[None, :, None, None]

    def inorm(y):
        m = y.mean(axis=(2, 3), keepdims=True)
        v = ((y - m) ** 2).mean(axis=(2, 3), keepdims=True)
        return (y - m) / jnp.sqrt(v + EPS)

    y = jnp.maximum(inorm(conv(_periodic_pad(x), w1, b1)), 0.0)
    return x + inorm(conv(_periodic_pad(y), w2, b2))


if __name__ == "__main__":
    N, C, H, W = 2, 4, 16, 16
    key = jax.random.PRNGKey(0)
    kx, k1, k2, k3, k4 = jax.random.split(key, 5)
    x = jax.random.normal(kx, (N, C, H, W), jnp.float32)
    w1 = jax.random.normal(k1, (C, C, 3, 3), jnp.float32) * 0.2
    b1 = jax.random.normal(k2, (C,), jnp.float32) * 0.1
    w2 = jax.random.normal(k3, (C, C, 3, 3), jnp.float32) * 0.2
    b2 = jax.random.normal(k4, (C,), jnp.float32) * 0.1

    ref = jax.block_until_ready(resblock_ref(x, w1, b1, w2, b2))

    # Default path: f32 MXU operands (exact arithmetic), all nb samples packed
    # into a single (nb*C, H*W) slab and one GEMM per conv.
    out = jax.block_until_ready(resblock_pallas(x, w1, b1, w2, b2))
    assert out.shape == x.shape and out.dtype == x.dtype
    err = float(jnp.max(jnp.abs(out - ref)))
    assert jnp.allclose(out, ref, atol=2e-4, rtol=1e-3), f"max abs err {err}"

    print("KERNEL_OK")
</pallas_src>

<mosaic_0001>
module attributes {stable_mosaic.version = 11 : i64} {
  func.func @_resblock_kernel(%arg0: i32, %arg1: memref<8x256xf32, #tpu.memory_space<vmem>>, %arg2: memref<8x72xf32, #tpu.memory_space<vmem>>, %arg3: memref<8x72xf32, #tpu.memory_space<vmem>>, %arg4: memref<8x256xf32, #tpu.memory_space<vmem>>) attributes {dimension_semantics = [#tpu.dimension_semantics<parallel>], iteration_bounds = array<i64: 1>, scalar_prefetch = 0 : i64, scratch_operands = 0 : i64, tpu.core_type = #tpu.core_type<tc>, window_params = [{transform_indices = @transform_0, window_bounds = array<i64: 8, 256>}, {pipeline_mode = #tpu.pipeline_mode<synchronous>, transform_indices = @transform_1, window_bounds = array<i64: 8, 72>}, {pipeline_mode = #tpu.pipeline_mode<synchronous>, transform_indices = @transform_2, window_bounds = array<i64: 8, 72>}, {transform_indices = @transform_3, window_bounds = array<i64: 8, 256>}]} {
    %c0 = arith.constant 0 : index
    %c0_0 = arith.constant 0 : index
    %0 = vector.load %arg1[%c0, %c0_0] : memref<8x256xf32, #tpu.memory_space<vmem>>, vector<8x256xf32>
    %1 = tpu.iota {dimensions = array<i32: 1>} : vector<1x256xi32>
    %c16_i32 = arith.constant 16 : i32
    %c0_i32 = arith.constant 0 : i32
    %2 = arith.cmpi eq, %c16_i32, %c0_i32 : i32
    %c1_i32 = arith.constant 1 : i32
    %3 = arith.select %2, %c1_i32, %c16_i32 : i32
    %4 = vector.broadcast %3 : i32 to vector<1x256xi32>
    %5 = arith.remsi %1, %4 : vector<1x256xi32>
    %c0_i32_1 = arith.constant 0 : i32
    %6 = vector.broadcast %c0_i32_1 : i32 to vector<1x256xi32>
    %7 = arith.cmpi ne, %5, %6 : vector<1x256xi32>
    %c0_i32_2 = arith.constant 0 : i32
    %8 = vector.broadcast %c0_i32_2 : i32 to vector<1x256xi32>
    %9 = arith.cmpi slt, %5, %8 : vector<1x256xi32>
    %c0_i32_3 = arith.constant 0 : i32
    %10 = arith.cmpi slt, %3, %c0_i32_3 : i32
    %11 = vector.broadcast %10 : i1 to vector<1x256xi1>
    %12 = vector.broadcast %11 : vector<1x256xi1> to vector<1x256xi1>
    %13 = arith.xori %9, %12 : vector<1x256xi1>
    %14 = arith.andi %13, %7 : vector<1x256xi1>
    %15 = vector.broadcast %3 : i32 to vector<1x256xi32>
    %16 = arith.addi %5, %15 : vector<1x256xi32>
    %17 = arith.select %14, %16, %5 : vector<1x256xi1>, vector<1x256xi32>
    %c0_i32_4 = arith.constant 0 : i32
    %18 = vector.broadcast %c0_i32_4 : i32 to vector<1x256xi32>
    %19 = arith.cmpi eq, %17, %18 : vector<1x256xi32>
    %c15_i32 = arith.constant 15 : i32
    %20 = vector.broadcast %c15_i32 : i32 to vector<1x256xi32>
    %21 = arith.cmpi eq, %17, %20 : vector<1x256xi32>
    %c16_i32_5 = arith.constant 16 : i32
    %22 = vector.broadcast %c16_i32_5 : i32 to vector<1x256xi32>
    %23 = arith.cmpi sge, %1, %22 : vector<1x256xi32>
    %c240_i32 = arith.constant 240 : i32
    %24 = vector.broadcast %c240_i32 : i32 to vector<1x256xi32>
    %25 = arith.cmpi slt, %1, %24 : vector<1x256xi32>
    %c0_6 = arith.constant 0 : index
    %c0_7 = arith.constant 0 : index
    %26 = vector.load %arg2[%c0_6, %c0_7] : memref<8x72xf32, #tpu.memory_space<vmem>>, vector<8x72xf32>
    %c0_8 = arith.constant 0 : index
    %c0_9 = arith.constant 0 : index
    %27 = vector.load %arg3[%c0_8, %c0_9] : memref<8x72xf32, #tpu.memory_space<vmem>>, vector<8x72xf32>
    %c17_i32 = arith.constant 17 : i32
    %28 = tpu.dynamic_rotate %0 by %c17_i32 dim 1 : vector<8x256xf32>, i32 -> vector<8x256xf32>
    %c1_i32_10 = arith.constant 1 : i32
    %29 = tpu.dynamic_rotate %0 by %c1_i32_10 dim 1 : vector<8x256xf32>, i32 -> vector<8x256xf32>
    %30 = vector.shape_cast %19 : vector<1x256xi1> to vector<1x256xi1>
    %31 = vector.broadcast %30 : vector<1x256xi1> to vector<8x256xi1>
    %32 = arith.select %31, %29, %28 : vector<8x256xi1>, vector<8x256xf32>
    %cst = arith.constant 0.000000e+00 : f32
    %33 = vector.shape_cast %23 : vector<1x256xi1> to vector<1x256xi1>
    %34 = vector.broadcast %33 : vector<1x256xi1> to vector<8x256xi1>
    %35 = vector.broadcast %cst : f32 to vector<8x256xf32>
    %36 = arith.select %34, %32, %35 : vector<8x256xi1>, vector<8x256xf32>
    %c16_i32_11 = arith.constant 16 : i32
    %37 = tpu.dynamic_rotate %0 by %c16_i32_11 dim 1 : vector<8x256xf32>, i32 -> vector<8x256xf32>
    %cst_12 = arith.constant 0.000000e+00 : f32
    %38 = vector.shape_cast %23 : vector<1x256xi1> to vector<1x256xi1>
    %39 = vector.broadcast %38 : vector<1x256xi1> to vector<8x256xi1>
    %40 = vector.broadcast %cst_12 : f32 to vector<8x256xf32>
    %41 = arith.select %39, %37, %40 : vector<8x256xi1>, vector<8x256xf32>
    %c15_i32_13 = arith.constant 15 : i32
    %42 = tpu.dynamic_rotate %0 by %c15_i32_13 dim 1 : vector<8x256xf32>, i32 -> vector<8x256xf32>
    %c31_i32 = arith.constant 31 : i32
    %43 = tpu.dynamic_rotate %0 by %c31_i32 dim 1 : vector<8x256xf32>, i32 -> vector<8x256xf32>
    %44 = vector.shape_cast %21 : vector<1x256xi1> to vector<1x256xi1>
    %45 = vector.broadcast %44 : vector<1x256xi1> to vector<8x256xi1>
    %46 = arith.select %45, %43, %42 : vector<8x256xi1>, vector<8x256xf32>
    %cst_14 = arith.constant 0.000000e+00 : f32
    %47 = vector.shape_cast %23 : vector<1x256xi1> to vector<1x256xi1>
    %48 = vector.broadcast %47 : vector<1x256xi1> to vector<8x256xi1>
    %49 = vector.broadcast %cst_14 : f32 to vector<8x256xf32>
    %50 = arith.select %48, %46, %49 : vector<8x256xi1>, vector<8x256xf32>
    %c241_i32 = arith.constant 241 : i32
    %51 = tpu.dynamic_rotate %0 by %c241_i32 dim 1 : vector<8x256xf32>, i32 -> vector<8x256xf32>
    %52 = vector.shape_cast %19 : vector<1x256xi1> to vector<1x256xi1>
    %53 = vector.broadcast %52 : vector<1x256xi1> to vector<8x256xi1>
    %54 = arith.select %53, %51, %29 : vector<8x256xi1>, vector<8x256xf32>
    %c255_i32 = arith.constant 255 : i32
    %55 = tpu.dynamic_rotate %0 by %c255_i32 dim 1 : vector<8x256xf32>, i32 -> vector<8x256xf32>
    %56 = vector.shape_cast %21 : vector<1x256xi1> to vector<1x256xi1>
    %57 = vector.broadcast %56 : vector<1x256xi1> to vector<8x256xi1>
    %58 = arith.select %57, %42, %55 : vector<8x256xi1>, vector<8x256xf32>
    %c225_i32 = arith.constant 225 : i32
    %59 = tpu.dynamic_rotate %0 by %c225_i32 dim 1 : vector<8x256xf32>, i32 -> vector<8x256xf32>
    %60 = vector.shape_cast %19 : vector<1x256xi1> to vector<1x256xi1>
    %61 = vector.broadcast %60 : vector<1x256xi1> to vector<8x256xi1>
    %62 = arith.select %61, %59, %51 : vector<8x256xi1>, vector<8x256xf32>
    %cst_15 = arith.constant 0.000000e+00 : f32
    %63 = vector.shape_cast %25 : vector<1x256xi1> to vector<1x256xi1>
    %64 = vector.broadcast %63 : vector<1x256xi1> to vector<8x256xi1>
    %65 = vector.broadcast %cst_15 : f32 to vector<8x256xf32>
    %66 = arith.select %64, %62, %65 : vector<8x256xi1>, vector<8x256xf32>
    %c240_i32_16 = arith.constant 240 : i32
    %67 = tpu.dynamic_rotate %0 by %c240_i32_16 dim 1 : vector<8x256xf32>, i32 -> vector<8x256xf32>
    %cst_17 = arith.constant 0.000000e+00 : f32
    %68 = vector.shape_cast %25 : vector<1x256xi1> to vector<1x256xi1>
    %69 = vector.broadcast %68 : vector<1x256xi1> to vector<8x256xi1>
    %70 = vector.broadcast %cst_17 : f32 to vector<8x256xf32>
    %71 = arith.select %69, %67, %70 : vector<8x256xi1>, vector<8x256xf32>
    %c239_i32 = arith.constant 239 : i32
    %72 = tpu.dynamic_rotate %0 by %c239_i32 dim 1 : vector<8x256xf32>, i32 -> vector<8x256xf32>
    %73 = vector.shape_cast %21 : vector<1x256xi1> to vector<1x256xi1>
    %74 = vector.broadcast %73 : vector<1x256xi1> to vector<8x256xi1>
    %75 = arith.select %74, %55, %72 : vector<8x256xi1>, vector<8x256xf32>
    %cst_18 = arith.constant 0.000000e+00 : f32
    %76 = vector.shape_cast %25 : vector<1x256xi1> to vector<1x256xi1>
    %77 = vector.broadcast %76 : vector<1x256xi1> to vector<8x256xi1>
    %78 = vector.broadcast %cst_18 : f32 to vector<8x256xf32>
    %79 = arith.select %77, %75, %78 : vector<8x256xi1>, vector<8x256xf32>
    %80 = tpu.concatenate %36, %41, %50, %54, %0, %58, %66, %71, %79 in 0 : vector<8x256xf32>, vector<8x256xf32>, vector<8x256xf32>, vector<8x256xf32>, vector<8x256xf32>, vector<8x256xf32>, vector<8x256xf32>, vector<8x256xf32>, vector<8x256xf32> -> vector<72x256xf32>
    %cst_19 = arith.constant dense<0.000000e+00> : vector<8x256xf32>
    %81 = tpu.matmul %26, %80, %cst_19 {dimension_numbers = #tpu.dot_dimension_numbers<[1], [0], [0], [1], [0, 0, 1, 1], [], []>} : vector<8x72xf32>, vector<72x256xf32>, vector<8x256xf32> -> vector<8x256xf32>
    %cst_20 = arith.constant dense<0.000000e+00> : vector<8xf32>
    %82 = vector.multi_reduction <add>, %81, %cst_20 [1] : vector<8x256xf32> to vector<8xf32>
    %83 = vector.shape_cast %82 : vector<8xf32> to vector<8x1xf32>
    %cst_21 = arith.constant 2.560000e+02 : f32
    %84 = vector.broadcast %cst_21 : f32 to vector<8x1xf32>
    %85 = arith.divf %83, %84 : vector<8x1xf32>
    %86 = vector.broadcast %85 : vector<8x1xf32> to vector<8x256xf32>
    %87 = arith.subf %81, %86 : vector<8x256xf32>
    %88 = arith.mulf %87, %87 : vector<8x256xf32>
    %cst_22 = arith.constant dense<0.000000e+00> : vector<8xf32>
    %89 = vector.multi_reduction <add>, %88, %cst_22 [1] : vector<8x256xf32> to vector<8xf32>
    %90 = vector.shape_cast %89 : vector<8xf32> to vector<8x1xf32>
    %cst_23 = arith.constant 2.560000e+02 : f32
    %91 = vector.broadcast %cst_23 : f32 to vector<8x1xf32>
    %92 = arith.divf %90, %91 : vector<8x1xf32>
    %cst_24 = arith.constant 9.99999974E-6 : f32
    %93 = vector.broadcast %cst_24 : f32 to vector<8x1xf32>
    %94 = arith.addf %92, %93 : vector<8x1xf32>
    %95 = math.rsqrt %94 : vector<8x1xf32>
    %96 = vector.broadcast %95 : vector<8x1xf32> to vector<8x256xf32>
    %97 = arith.mulf %87, %96 : vector<8x256xf32>
    %cst_25 = arith.constant 0.000000e+00 : f32
    %98 = vector.broadcast %cst_25 : f32 to vector<8x256xf32>
    %99 = arith.maximumf %97, %98 : vector<8x256xf32>
    %c17_i32_26 = arith.constant 17 : i32
    %100 = tpu.dynamic_rotate %99 by %c17_i32_26 dim 1 : vector<8x256xf32>, i32 -> vector<8x256xf32>
    %c1_i32_27 = arith.constant 1 : i32
    %101 = tpu.dynamic_rotate %99 by %c1_i32_27 dim 1 : vector<8x256xf32>, i32 -> vector<8x256xf32>
    %102 = vector.shape_cast %19 : vector<1x256xi1> to vector<1x256xi1>
    %103 = vector.broadcast %102 : vector<1x256xi1> to vector<8x256xi1>
    %104 = arith.select %103, %101, %100 : vector<8x256xi1>, vector<8x256xf32>
    %cst_28 = arith.constant 0.000000e+00 : f32
    %105 = vector.shape_cast %23 : vector<1x256xi1> to vector<1x256xi1>
    %106 = vector.broadcast %105 : vector<1x256xi1> to vector<8x256xi1>
    %107 = vector.broadcast %cst_28 : f32 to vector<8x256xf32>
    %108 = arith.select %106, %104, %107 : vector<8x256xi1>, vector<8x256xf32>
    %c16_i32_29 = arith.constant 16 : i32
    %109 = tpu.dynamic_rotate %99 by %c16_i32_29 dim 1 : vector<8x256xf32>, i32 -> vector<8x256xf32>
    %cst_30 = arith.constant 0.000000e+00 : f32
    %110 = vector.shape_cast %23 : vector<1x256xi1> to vector<1x256xi1>
    %111 = vector.broadcast %110 : vector<1x256xi1> to vector<8x256xi1>
    %112 = vector.broadcast %cst_30 : f32 to vector<8x256xf32>
    %113 = arith.select %111, %109, %112 : vector<8x256xi1>, vector<8x256xf32>
    %c15_i32_31 = arith.constant 15 : i32
    %114 = tpu.dynamic_rotate %99 by %c15_i32_31 dim 1 : vector<8x256xf32>, i32 -> vector<8x256xf32>
    %c31_i32_32 = arith.constant 31 : i32
    %115 = tpu.dynamic_rotate %99 by %c31_i32_32 dim 1 : vector<8x256xf32>, i32 -> vector<8x256xf32>
    %116 = vector.shape_cast %21 : vector<1x256xi1> to vector<1x256xi1>
    %117 = vector.broadcast %116 : vector<1x256xi1> to vector<8x256xi1>
    %118 = arith.select %117, %115, %114 : vector<8x256xi1>, vector<8x256xf32>
    %cst_33 = arith.constant 0.000000e+00 : f32
    %119 = vector.shape_cast %23 : vector<1x256xi1> to vector<1x256xi1>
    %120 = vector.broadcast %119 : vector<1x256xi1> to vector<8x256xi1>
    %121 = vector.broadcast %cst_33 : f32 to vector<8x256xf32>
    %122 = arith.select %120, %118, %121 : vector<8x256xi1>, vector<8x256xf32>
    %c241_i32_34 = arith.constant 241 : i32
    %123 = tpu.dynamic_rotate %99 by %c241_i32_34 dim 1 : vector<8x256xf32>, i32 -> vector<8x256xf32>
    %124 = vector.shape_cast %19 : vector<1x256xi1> to vector<1x256xi1>
    %125 = vector.broadcast %124 : vector<1x256xi1> to vector<8x256xi1>
    %126 = arith.select %125, %123, %101 : vector<8x256xi1>, vector<8x256xf32>
    %c255_i32_35 = arith.constant 255 : i32
    %127 = tpu.dynamic_rotate %99 by %c255_i32_35 dim 1 : vector<8x256xf32>, i32 -> vector<8x256xf32>
    %128 = vector.shape_cast %21 : vector<1x256xi1> to vector<1x256xi1>
    %129 = vector.broadcast %128 : vector<1x256xi1> to vector<8x256xi1>
    %130 = arith.select %129, %114, %127 : vector<8x256xi1>, vector<8x256xf32>
    %c225_i32_36 = arith.constant 225 : i32
    %131 = tpu.dynamic_rotate %99 by %c225_i32_36 dim 1 : vector<8x256xf32>, i32 -> vector<8x256xf32>
    %132 = vector.shape_cast %19 : vector<1x256xi1> to vector<1x256xi1>
    %133 = vector.broadcast %132 : vector<1x256xi1> to vector<8x256xi1>
    %134 = arith.select %133, %131, %123 : vector<8x256xi1>, vector<8x256xf32>
    %cst_37 = arith.constant 0.000000e+00 : f32
    %135 = vector.shape_cast %25 : vector<1x256xi1> to vector<1x256xi1>
    %136 = vector.broadcast %135 : vector<1x256xi1> to vector<8x256xi1>
    %137 = vector.broadcast %cst_37 : f32 to vector<8x256xf32>
    %138 = arith.select %136, %134, %137 : vector<8x256xi1>, vector<8x256xf32>
    %c240_i32_38 = arith.constant 240 : i32
    %139 = tpu.dynamic_rotate %99 by %c240_i32_38 dim 1 : vector<8x256xf32>, i32 -> vector<8x256xf32>
    %cst_39 = arith.constant 0.000000e+00 : f32
    %140 = vector.shape_cast %25 : vector<1x256xi1> to vector<1x256xi1>
    %141 = vector.broadcast %140 : vector<1x256xi1> to vector<8x256xi1>
    %142 = vector.broadcast %cst_39 : f32 to vector<8x256xf32>
    %143 = arith.select %141, %139, %142 : vector<8x256xi1>, vector<8x256xf32>
    %c239_i32_40 = arith.constant 239 : i32
    %144 = tpu.dynamic_rotate %99 by %c239_i32_40 dim 1 : vector<8x256xf32>, i32 -> vector<8x256xf32>
    %145 = vector.shape_cast %21 : vector<1x256xi1> to vector<1x256xi1>
    %146 = vector.broadcast %145 : vector<1x256xi1> to vector<8x256xi1>
    %147 = arith.select %146, %127, %144 : vector<8x256xi1>, vector<8x256xf32>
    %cst_41 = arith.constant 0.000000e+00 : f32
    %148 = vector.shape_cast %25 : vector<1x256xi1> to vector<1x256xi1>
    %149 = vector.broadcast %148 : vector<1x256xi1> to vector<8x256xi1>
    %150 = vector.broadcast %cst_41 : f32 to vector<8x256xf32>
    %151 = arith.select %149, %147, %150 : vector<8x256xi1>, vector<8x256xf32>
    %152 = tpu.concatenate %108, %113, %122, %126, %99, %130, %138, %143, %151 in 0 : vector<8x256xf32>, vector<8x256xf32>, vector<8x256xf32>, vector<8x256xf32>, vector<8x256xf32>, vector<8x256xf32>, vector<8x256xf32>, vector<8x256xf32>, vector<8x256xf32> -> vector<72x256xf32>
    %cst_42 = arith.constant dense<0.000000e+00> : vector<8x256xf32>
    %153 = tpu.matmul %27, %152, %cst_42 {dimension_numbers = #tpu.dot_dimension_numbers<[1], [0], [0], [1], [0, 0, 1, 1], [], []>} : vector<8x72xf32>, vector<72x256xf32>, vector<8x256xf32> -> vector<8x256xf32>
    %cst_43 = arith.constant dense<0.000000e+00> : vector<8xf32>
    %154 = vector.multi_reduction <add>, %153, %cst_43 [1] : vector<8x256xf32> to vector<8xf32>
    %155 = vector.shape_cast %154 : vector<8xf32> to vector<8x1xf32>
    %cst_44 = arith.constant 2.560000e+02 : f32
    %156 = vector.broadcast %cst_44 : f32 to vector<8x1xf32>
    %157 = arith.divf %155, %156 : vector<8x1xf32>
    %158 = vector.broadcast %157 : vector<8x1xf32> to vector<8x256xf32>
    %159 = arith.subf %153, %158 : vector<8x256xf32>
    %160 = arith.mulf %159, %159 : vector<8x256xf32>
    %cst_45 = arith.constant dense<0.000000e+00> : vector<8xf32>
    %161 = vector.multi_reduction <add>, %160, %cst_45 [1] : vector<8x256xf32> to vector<8xf32>
    %162 = vector.shape_cast %161 : vector<8xf32> to vector<8x1xf32>
    %cst_46 = arith.constant 2.560000e+02 : f32
    %163 = vector.broadcast %cst_46 : f32 to vector<8x1xf32>
    %164 = arith.divf %162, %163 : vector<8x1xf32>
    %cst_47 = arith.constant 9.99999974E-6 : f32
    %165 = vector.broadcast %cst_47 : f32 to vector<8x1xf32>
    %166 = arith.addf %164, %165 : vector<8x1xf32>
    %167 = math.rsqrt %166 : vector<8x1xf32>
    %168 = vector.broadcast %167 : vector<8x1xf32> to vector<8x256xf32>
    %169 = arith.mulf %159, %168 : vector<8x256xf32>
    %170 = arith.addf %0, %169 : vector<8x256xf32>
    %c0_48 = arith.constant 0 : index
    %c0_49 = arith.constant 0 : index
    %171 = vector.load %arg4[%c0_48, %c0_49] : memref<8x256xf32, #tpu.memory_space<vmem>>, vector<8x256xf32>
    tpu.vector_store %arg4[%c0_48, %c0_49], %170 {strides = array<i32>} : memref<8x256xf32, #tpu.memory_space<vmem>>, vector<8x256xf32>,
    return
  }
  func.func @transform_0(%arg0: i32) -> (i32, i32) {
    %c0_i32 = arith.constant 0 : i32
    %c0_i32_0 = arith.constant 0 : i32
    return %arg0, %c0_i32 : i32, i32
  }
  func.func @transform_1(%arg0: i32) -> (i32, i32) {
    %c0_i32 = arith.constant 0 : i32
    %c0_i32_0 = arith.constant 0 : i32
    %c0_i32_1 = arith.constant 0 : i32
    return %c0_i32, %c0_i32_0 : i32, i32
  }
  func.func @transform_2(%arg0: i32) -> (i32, i32) {
    %c0_i32 = arith.constant 0 : i32
    %c0_i32_0 = arith.constant 0 : i32
    %c0_i32_1 = arith.constant 0 : i32
    return %c0_i32, %c0_i32_0 : i32, i32
  }
  func.func @transform_3(%arg0: i32) -> (i32, i32) {
    %c0_i32 = arith.constant 0 : i32
    %c0_i32_0 = arith.constant 0 : i32
    return %arg0, %c0_i32 : i32, i32
  }
}

</mosaic_0001>

<llo_original>
// kernel: resblock_pallas.1
$region0: #{resblock_pallas.1}
  #allocation0 [shape = 'u32[]', space=smem, size = 0x4, offset = 0x4, fixed_abs, tag = 'smem constant byte address 0x4 - core index']
  #allocation1 [shape = 'u32[144,128]{1,0:T(1,128)}', space=vmem, size = 0x12000, scoped, tag = 'internal scratch']
  %s0 = inlined_call_operand.vmem [shape: f32[8,256], index: 0, kind: input, shape index: {}]
  %s1 = inlined_call_operand.vmem [shape: f32[8,72], index: 1, kind: input, shape index: {}]
  %s2 = inlined_call_operand.vmem [shape: f32[8,72], index: 2, kind: input, shape index: {}]
  %s3 = inlined_call_operand.vmem [shape: f32[8,256], index: 3, kind: output, shape index: {}]
  %s4 = sld [smem:[#allocation0]]
  $region22: #{resblock_pallas.1} parent=0
    _
  %s6 = ssub.s32 1, %s4
  %s7 = scalar_select 0, %s6, %s4
  // Predicated region
  $region2: #{resblock_pallas.1} parent=0 // pred_check
    _
  $region3: #{resblock_pallas.1} parent=0 // pred_check_branch
    %9 = sbr.rel (0) target = $region5
  $region4: #{resblock_pallas.1} parent=0 // pred_region
    _
  $region5: #{resblock_pallas.1} parent=0 // pred_fallthru
    _
  // Predicated region
  $region6: #{resblock_pallas.1} parent=0 // pred_check
    _
  $region7: #{resblock_pallas.1} parent=0 // pred_check_branch
    %11 = sbr.rel (0) target = $region9
  $region8: #{resblock_pallas.1} parent=0 // pred_region
    _
  $region9: #{resblock_pallas.1} parent=0 // pred_fallthru
    _
  // Predicated region
  $region10: #{resblock_pallas.1} parent=0 // pred_check
    _
  $region11: #{resblock_pallas.1} parent=0 // pred_check_branch
    %13 = sbr.rel (0) target = $region13
  $region12: #{resblock_pallas.1} parent=0 // pred_region
    _
  $region13: #{resblock_pallas.1} parent=0 // pred_fallthru
    _
  %v14 = vld [vmem:[%s0] sm:$0xff]
  %v15 = vld [vmem:[%s0 + $0x8] sm:$0xff]
  %v16 = vlaneseq
  %v17 = vand.u32 %v16, 127
  %v18 = vadd.s32 %v17, 128
  %vm19 = vcmp.lt.s32.totalorder %v17, 0
  %v20 = vsub.s32 0, %v17
  %v21 = vsel %vm19, %v20, %v17
  %v22 = vshrl.u32 %v21, 4
  %v23 = vand.u32 %v21, 15
  %v24 = vsub.s32 0, %v23
  %v25 = vsel %vm19, %v24, %v23
  %vm26 = vcmp.lt.s32.totalorder %v18, 0
  %v27 = vsub.s32 0, %v18
  %v28 = vsel %vm26, %v27, %v18
  %v29 = vshrl.u32 %v28, 4
  %v30 = vand.u32 %v28, 15
  %v31 = vsub.s32 0, %v30
  %v32 = vsel %vm26, %v31, %v30
  %vm33 = vcmp.ne.s32.totalorder %v25, 0
  %vm34 = vcmp.ne.s32.totalorder %v32, 0
  %vm35 = vcmp.lt.s32.totalorder %v25, 0
  %vm36 = vcmp.lt.s32.totalorder %v32, 0
  %vm37 = vmand %vm35, %vm33
  %vm38 = vmand %vm36, %vm34
  %v39 = vadd.s32 %v25, 16
  %v40 = vadd.s32 %v32, 16
  %v41 = vsel %vm37, %v39, %v25
  %v42 = vsel %vm38, %v40, %v32
  %vm43 = vcmp.eq.s32.totalorder %v41, 0
  %vm44 = vcmp.eq.s32.totalorder %v42, 0
  %vm45 = vcmp.eq.s32.totalorder %v41, 15
  %vm46 = vcmp.eq.s32.totalorder %v42, 15
  %vm47 = vcmp.ge.s32.totalorder %v17, 16
  %vm48 = vcmp.ge.s32.totalorder %v18, 16
  %vm49 = vcmp.lt.s32.totalorder %v17, 240
  %vm50 = vcmp.lt.s32.totalorder %v18, 240
  %v51 = vld [vmem:[%s1] sm:$0xff]
  %v52 = vld [vmem:[%s2] sm:$0xff]
  %53 = vrot.lane.b32.xlu0 %v14, 17
  %v54 = vpop.permute.xlu0 %53
  %55 = vrot.lane.b32.xlu0 %v15, 17
  %v56 = vpop.permute.xlu0 %55
  %vm57 = vcmp.lt.s32.totalorder %v17, 17
  %v58 = vsel %vm57, %v54, %v56
  %v59 = vsel %vm57, %v56, %v54
  %60 = vrot.lane.b32.xlu0 %v14, 1
  %v61 = vpop.permute.xlu0 %60
  %62 = vrot.lane.b32.xlu0 %v15, 1
  %v63 = vpop.permute.xlu0 %62
  %vm64 = vcmp.lt.s32.totalorder %v17, 1
  %v65 = vsel %vm64, %v61, %v63
  %v66 = vsel %vm64, %v63, %v61
  %v67 = vsel %vm43, 1, 0
  %v68 = vsel %vm44, 1, 0
  %vm69 = vcmp.eq.s32.totalorder %v67, 1
  %vm70 = vcmp.eq.s32.totalorder %v68, 1
  %v71 = vsel %vm69, %v66, %v59
  %v72 = vsel %vm70, %v65, %v58
  %v73 = vsel %vm47, 1, 0
  %v74 = vsel %vm48, 1, 0
  %vm75 = vcmp.eq.s32.totalorder %v73, 1
  %vm76 = vcmp.eq.s32.totalorder %v74, 1
  %v77 = vsel %vm75, %v71, 0.0
  %v78 = vsel %vm76, %v72, 0.0
  %79 = vrot.lane.b32.xlu0 %v14, 16
  %v80 = vpop.permute.xlu0 %79
  %81 = vrot.lane.b32.xlu0 %v15, 16
  %v82 = vpop.permute.xlu0 %81
  %vm83 = vcmp.lt.s32.totalorder %v17, 16
  %v84 = vsel %vm83, %v80, %v82
  %v85 = vsel %vm83, %v82, %v80
  %v86 = vsel %vm75, %v85, 0.0
  %v87 = vsel %vm76, %v84, 0.0
  %88 = vrot.lane.b32.xlu0 %v14, 15
  %v89 = vpop.permute.xlu0 %88
  %90 = vrot.lane.b32.xlu0 %v15, 15
  %v91 = vpop.permute.xlu0 %90
  %vm92 = vcmp.lt.s32.totalorder %v17, 15
  %v93 = vsel %vm92, %v89, %v91
  %v94 = vsel %vm92, %v91, %v89
  %95 = vrot.lane.b32.xlu0 %v14, 31
  %v96 = vpop.permute.xlu0 %95
  %97 = vrot.lane.b32.xlu0 %v15, 31
  %v98 = vpop.permute.xlu0 %97
  %vm99 = vcmp.lt.s32.totalorder %v17, 31
  %v100 = vsel %vm99, %v96, %v98
  %v101 = vsel %vm99, %v98, %v96
  %v102 = vsel %vm45, 1, 0
  %v103 = vsel %vm46, 1, 0
  %vm104 = vcmp.eq.s32.totalorder %v102, 1
  %vm105 = vcmp.eq.s32.totalorder %v103, 1
  %v106 = vsel %vm104, %v101, %v94
  %v107 = vsel %vm105, %v100, %v93
  %v108 = vsel %vm75, %v106, 0.0
  %v109 = vsel %vm76, %v107, 0.0
  %110 = vrot.lane.b32.xlu0 %v14, 113
  %v111 = vpop.permute.xlu0 %110
  %112 = vrot.lane.b32.xlu0 %v15, 113
  %v113 = vpop.permute.xlu0 %112
  %vm114 = vcmp.lt.s32.totalorder %v17, 113
  %v115 = vsel %vm114, %v111, %v113
  %v116 = vsel %vm114, %v113, %v111
  %v117 = vsel %vm69, %v115, %v66
  %v118 = vsel %vm70, %v116, %v65
  %119 = vrot.lane.b32.xlu0 %v14, 127
  %v120 = vpop.permute.xlu0 %119
  %121 = vrot.lane.b32.xlu0 %v15, 127
  %v122 = vpop.permute.xlu0 %121
  %vm123 = vcmp.lt.s32.totalorder %v17, 127
  %v124 = vsel %vm123, %v120, %v122
  %v125 = vsel %vm123, %v122, %v120
  %v126 = vsel %vm104, %v94, %v124
  %v127 = vsel %vm105, %v93, %v125
  %128 = vrot.lane.b32.xlu0 %v14, 97
  %v129 = vpop.permute.xlu0 %128
  %130 = vrot.lane.b32.xlu0 %v15, 97
  %v131 = vpop.permute.xlu0 %130
  %vm132 = vcmp.lt.s32.totalorder %v17, 97
  %v133 = vsel %vm132, %v129, %v131
  %v134 = vsel %vm132, %v131, %v129
  %v135 = vsel %vm69, %v133, %v115
  %v136 = vsel %vm70, %v134, %v116
  %v137 = vsel %vm49, 1, 0
  %v138 = vsel %vm50, 1, 0
  %vm139 = vcmp.eq.s32.totalorder %v137, 1
  %vm140 = vcmp.eq.s32.totalorder %v138, 1
  %v141 = vsel %vm139, %v135, 0.0
  %v142 = vsel %vm140, %v136, 0.0
  %143 = vrot.lane.b32.xlu0 %v14, 112
  %v144 = vpop.permute.xlu0 %143
  %145 = vrot.lane.b32.xlu0 %v15, 112
  %v146 = vpop.permute.xlu0 %145
  %vm147 = vcmp.lt.s32.totalorder %v17, 112
  %v148 = vsel %vm147, %v144, %v146
  %v149 = vsel %vm147, %v146, %v144
  %v150 = vsel %vm139, %v148, 0.0
  %v151 = vsel %vm140, %v149, 0.0
  %152 = vrot.lane.b32.xlu0 %v14, 111
  %v153 = vpop.permute.xlu0 %152
  %154 = vrot.lane.b32.xlu0 %v15, 111
  %v155 = vpop.permute.xlu0 %154
  %vm156 = vcmp.lt.s32.totalorder %v17, 111
  %v157 = vsel %vm156, %v153, %v155
  %v158 = vsel %vm156, %v155, %v153
  %v159 = vsel %vm104, %v124, %v157
  %v160 = vsel %vm105, %v125, %v158
  %v161 = vsel %vm139, %v159, 0.0
  %v162 = vsel %vm140, %v160, 0.0
  %vm163 = vcmask 588800
  %v165 = vsel %vm163, %v51, 0
  %167 = vmatprep.subr.mxu0 0.0
  %168 = vmatpush1.msra.mxu0 0.0
  %169 = vmatprep.subr.mxu0 0.0
  %170 = vmatpush1.msra.mxu0 0.0
  %171 = vmatprep.subr.mxu0 0.0
  %172 = vmatpush1.msra.mxu0 0.0
  %173 = vmatprep.subr.mxu0 0.0
  %174 = vmatpush1.msra.mxu0 0.0
  %175 = vmatprep.subr.mxu0 0.0
  %176 = vmatpush1.msra.mxu0 0.0
  %177 = vmatprep.subr.mxu0 0.0
  %178 = vmatpush1.msra.mxu0 0.0
  %179 = vmatprep.subr.mxu0 0.0
  %180 = vmatpush1.msra.mxu0 0.0
  %181 = vmatprep.subr.mxu0 %v162
  %182 = vmatpush1.msra.mxu0 %v161
  %183 = vmatprep.subr.mxu0 %v151
  %184 = vmatpush1.msra.mxu0 %v150
  %185 = vmatprep.subr.mxu0 %v142
  %186 = vmatpush1.msra.mxu0 %v141
  %187 = vmatprep.subr.mxu0 %v127
  %188 = vmatpush1.msra.mxu0 %v126
  %189 = vmatprep.subr.mxu0 %v15
  %190 = vmatpush1.msra.mxu0 %v14
  %191 = vmatprep.subr.mxu0 %v118
  %192 = vmatpush1.msra.mxu0 %v117
  %193 = vmatprep.subr.mxu0 %v109
  %194 = vmatpush1.msra.mxu0 %v108
  %195 = vmatprep.subr.mxu0 %v87
  %196 = vmatpush1.msra.mxu0 %v86
  %197 = vmatprep.subr.mxu0 %v78
  %198 = vmatpush1.msra.mxu0 %v77
  %199 = vmatprep.subr.mxu0 0.0
  %200 = vmatpush2.msra.mxu0 0.0
  %201 = vmatprep.subr.mxu0 0.0
  %202 = vmatpush2.msra.mxu0 0.0
  %203 = vmatprep.subr.mxu0 0.0
  %204 = vmatpush2.msra.mxu0 0.0
  %205 = vmatprep.subr.mxu0 0.0
  %206 = vmatpush2.msra.mxu0 0.0
  %207 = vmatprep.subr.mxu0 0.0
  %208 = vmatpush2.msra.mxu0 0.0
  %209 = vmatprep.subr.mxu0 0.0
  %210 = vmatpush2.msra.mxu0 0.0
  %211 = vmatprep.subr.mxu0 0.0
  %212 = vmatpush2.msra.mxu0 0.0
  %213 = vmatprep.subr.mxu0 0.0
  %214 = vmatpush2.msra.mxu0 0.0
  %215 = vmatprep.subr.mxu0 0.0
  %216 = vmatpush2.msra.mxu0 0.0
  %217 = vmatprep.subr.mxu0 0.0
  %218 = vmatpush2.msra.mxu0 0.0
  %219 = vmatprep.subr.mxu0 0.0
  %220 = vmatpush2.msra.mxu0 0.0
  %221 = vmatprep.subr.mxu0 0.0
  %222 = vmatpush2.msra.mxu0 0.0
  %223 = vmatprep.subr.mxu0 0.0
  %224 = vmatpush2.msra.mxu0 0.0
  %225 = vmatprep.subr.mxu0 0.0
  %226 = vmatpush2.msra.mxu0 0.0
  %227 = vmatprep.subr.mxu0 0.0
  %228 = vmatpush2.msra.mxu0 0.0
  %229 = vmatprep.subr.mxu0 0.0
  %230 = vmatpush2.msra.mxu0 0.0
  %231 = vmatprep.mubr.f32.mxu0 0.0
  %232 = vmatmul.mubr.f32.gmra.mxu0 %v165
  %v233 = vpop.f32.mrf.mxu0
  %v234 = vadd.f32 0.0, %v233
  %v235 = vpop.f32.mrf.mxu0
  %v236 = vadd.f32 0.0, %v235
  %237 = vdwg.mxu0
  %v238 = vadd.f32 %v234, %v236
  %239 = vadd.xlane.f32.xlu0 %v238
  %v240 = vpop.xlane.xlu0 %239
  %v241 = vrcp.pop 256.0
  %v242 = vmul.f32 %v240, %v241
  %v243 = vsub.f32 %v234, %v242
  %v244 = vsub.f32 %v236, %v242
  %v245 = vmul.f32 %v243, %v243
  %v246 = vmul.f32 %v244, %v244
  %v247 = vadd.f32 %v245, %v246
  %248 = vadd.xlane.f32.xlu0 %v247
  %v249 = vpop.xlane.xlu0 %248
  %v250 = vmul.f32 %v249, %v241
  %v251 = vadd.f32 %v250, 1e-05
  %v252 = vrsqrt.pop %v251
  %v253 = vmul.f32 %v243, %v252
  %v254 = vmul.f32 %v244, %v252
  %v255 = vmax.f32 %v253, 0.0
  %v256 = vmax.f32 %v254, 0.0
  %257 = vrot.lane.b32.xlu0 %v255, 17
  %v258 = vpop.permute.xlu0 %257
  %259 = vrot.lane.b32.xlu0 %v256, 17
  %v260 = vpop.permute.xlu0 %259
  %v261 = vsel %vm57, %v258, %v260
  %v262 = vsel %vm57, %v260, %v258
  %263 = vrot.lane.b32.xlu0 %v255, 1
  %v264 = vpop.permute.xlu0 %263
  %265 = vrot.lane.b32.xlu0 %v256, 1
  %v266 = vpop.permute.xlu0 %265
  %v267 = vsel %vm64, %v264, %v266
  %v268 = vsel %vm64, %v266, %v264
  %v269 = vsel %vm69, %v268, %v262
  %v270 = vsel %vm70, %v267, %v261
  %v271 = vsel %vm75, %v269, 0.0
  %v272 = vsel %vm76, %v270, 0.0
  %273 = vrot.lane.b32.xlu0 %v255, 16
  %v274 = vpop.permute.xlu0 %273
  %275 = vrot.lane.b32.xlu0 %v256, 16
  %v276 = vpop.permute.xlu0 %275
  %v277 = vsel %vm83, %v274, %v276
  %v278 = vsel %vm83, %v276, %v274
  %v279 = vsel %vm75, %v278, 0.0
  %v280 = vsel %vm76, %v277, 0.0
  %281 = vrot.lane.b32.xlu0 %v255, 15
  %v282 = vpop.permute.xlu0 %281
  %283 = vrot.lane.b32.xlu0 %v256, 15
  %v284 = vpop.permute.xlu0 %283
  %v285 = vsel %vm92, %v282, %v284
  %v286 = vsel %vm92, %v284, %v282
  %287 = vrot.lane.b32.xlu0 %v255, 31
  %v288 = vpop.permute.xlu0 %287
  %289 = vrot.lane.b32.xlu0 %v256, 31
  %v290 = vpop.permute.xlu0 %289
  %v291 = vsel %vm99, %v288, %v290
  %v292 = vsel %vm99, %v290, %v288
  %v293 = vsel %vm104, %v292, %v286
  %v294 = vsel %vm105, %v291, %v285
  %v295 = vsel %vm75, %v293, 0.0
  %v296 = vsel %vm76, %v294, 0.0
  %297 = vrot.lane.b32.xlu0 %v255, 113
  %v298 = vpop.permute.xlu0 %297
  %299 = vrot.lane.b32.xlu0 %v256, 113
  %v300 = vpop.permute.xlu0 %299
  %v301 = vsel %vm114, %v298, %v300
  %v302 = vsel %vm114, %v300, %v298
  %v303 = vsel %vm69, %v301, %v268
  %v304 = vsel %vm70, %v302, %v267
  %305 = vrot.lane.b32.xlu0 %v255, 127
  %v306 = vpop.permute.xlu0 %305
  %307 = vrot.lane.b32.xlu0 %v256, 127
  %v308 = vpop.permute.xlu0 %307
  %v309 = vsel %vm123, %v306, %v308
  %v310 = vsel %vm123, %v308, %v306
  %v311 = vsel %vm104, %v286, %v309
  %v312 = vsel %vm105, %v285, %v310
  %313 = vrot.lane.b32.xlu0 %v255, 97
  %v314 = vpop.permute.xlu0 %313
  %315 = vrot.lane.b32.xlu0 %v256, 97
  %v316 = vpop.permute.xlu0 %315
  %v317 = vsel %vm132, %v314, %v316
  %v318 = vsel %vm132, %v316, %v314
  %v319 = vsel %vm69, %v317, %v301
  %v320 = vsel %vm70, %v318, %v302
  %v321 = vsel %vm139, %v319, 0.0
  %v322 = vsel %vm140, %v320, 0.0
  %323 = vrot.lane.b32.xlu0 %v255, 112
  %v324 = vpop.permute.xlu0 %323
  %325 = vrot.lane.b32.xlu0 %v256, 112
  %v326 = vpop.permute.xlu0 %325
  %v327 = vsel %vm147, %v324, %v326
  %v328 = vsel %vm147, %v326, %v324
  %v329 = vsel %vm139, %v327, 0.0
  %v330 = vsel %vm140, %v328, 0.0
  %331 = vrot.lane.b32.xlu0 %v255, 111
  %v332 = vpop.permute.xlu0 %331
  %333 = vrot.lane.b32.xlu0 %v256, 111
  %v334 = vpop.permute.xlu0 %333
  %v335 = vsel %vm156, %v332, %v334
  %v336 = vsel %vm156, %v334, %v332
  %v337 = vsel %vm104, %v309, %v335
  %v338 = vsel %vm105, %v310, %v336
  %v339 = vsel %vm139, %v337, 0.0
  %v340 = vsel %vm140, %v338, 0.0
  %v342 = vsel %vm163, %v52, 0
  %344 = vmatprep.subr.mxu0 0.0
  %345 = vmatpush1.msra.mxu0 0.0
  %346 = vmatprep.subr.mxu0 0.0
  %347 = vmatpush1.msra.mxu0 0.0
  %348 = vmatprep.subr.mxu0 0.0
  %349 = vmatpush1.msra.mxu0 0.0
  %350 = vmatprep.subr.mxu0 0.0
  %351 = vmatpush1.msra.mxu0 0.0
  %352 = vmatprep.subr.mxu0 0.0
  %353 = vmatpush1.msra.mxu0 0.0
  %354 = vmatprep.subr.mxu0 0.0
  %355 = vmatpush1.msra.mxu0 0.0
  %356 = vmatprep.subr.mxu0 0.0
  %357 = vmatpush1.msra.mxu0 0.0
  %358 = vmatprep.subr.mxu0 %v340
  %359 = vmatpush1.msra.mxu0 %v339
  %360 = vmatprep.subr.mxu0 %v330
  %361 = vmatpush1.msra.mxu0 %v329
  %362 = vmatprep.subr.mxu0 %v322
  %363 = vmatpush1.msra.mxu0 %v321
  %364 = vmatprep.subr.mxu0 %v312
  %365 = vmatpush1.msra.mxu0 %v311
  %366 = vmatprep.subr.mxu0 %v256
  %367 = vmatpush1.msra.mxu0 %v255
  %368 = vmatprep.subr.mxu0 %v304
  %369 = vmatpush1.msra.mxu0 %v303
  %370 = vmatprep.subr.mxu0 %v296
  %371 = vmatpush1.msra.mxu0 %v295
  %372 = vmatprep.subr.mxu0 %v280
  %373 = vmatpush1.msra.mxu0 %v279
  %374 = vmatprep.subr.mxu0 %v272
  %375 = vmatpush1.msra.mxu0 %v271
  %376 = vmatprep.subr.mxu0 0.0
  %377 = vmatpush2.msra.mxu0 0.0
  %378 = vmatprep.subr.mxu0 0.0
  %379 = vmatpush2.msra.mxu0 0.0
  %380 = vmatprep.subr.mxu0 0.0
  %381 = vmatpush2.msra.mxu0 0.0
  %382 = vmatprep.subr.mxu0 0.0
  %383 = vmatpush2.msra.mxu0 0.0
  %384 = vmatprep.subr.mxu0 0.0
  %385 = vmatpush2.msra.mxu0 0.0
  %386 = vmatprep.subr.mxu0 0.0
  %387 = vmatpush2.msra.mxu0 0.0
  %388 = vmatprep.subr.mxu0 0.0
  %389 = vmatpush2.msra.mxu0 0.0
  %390 = vmatprep.subr.mxu0 0.0
  %391 = vmatpush2.msra.mxu0 0.0
  %392 = vmatprep.subr.mxu0 0.0
  %393 = vmatpush2.msra.mxu0 0.0
  %394 = vmatprep.subr.mxu0 0.0
  %395 = vmatpush2.msra.mxu0 0.0
  %396 = vmatprep.subr.mxu0 0.0
  %397 = vmatpush2.msra.mxu0 0.0
  %398 = vmatprep.subr.mxu0 0.0
  %399 = vmatpush2.msra.mxu0 0.0
  %400 = vmatprep.subr.mxu0 0.0
  %401 = vmatpush2.msra.mxu0 0.0
  %402 = vmatprep.subr.mxu0 0.0
  %403 = vmatpush2.msra.mxu0 0.0
  %404 = vmatprep.subr.mxu0 0.0
  %405 = vmatpush2.msra.mxu0 0.0
  %406 = vmatprep.subr.mxu0 0.0
  %407 = vmatpush2.msra.mxu0 0.0
  %408 = vmatprep.mubr.f32.mxu0 0.0
  %409 = vmatmul.mubr.f32.gmra.mxu0 %v342
  %v410 = vpop.f32.mrf.mxu0
  %v411 = vadd.f32 0.0, %v410
  %v412 = vpop.f32.mrf.mxu0
  %v413 = vadd.f32 0.0, %v412
  %414 = vdwg.mxu0
  %v415 = vadd.f32 %v411, %v413
  %416 = vadd.xlane.f32.xlu0 %v415
  %v417 = vpop.xlane.xlu0 %416
  %v418 = vmul.f32 %v417, %v241
  %v419 = vsub.f32 %v411, %v418
  %v420 = vsub.f32 %v413, %v418
  %v421 = vmul.f32 %v419, %v419
  %v422 = vmul.f32 %v420, %v420
  %v423 = vadd.f32 %v421, %v422
  %424 = vadd.xlane.f32.xlu0 %v423
  %v425 = vpop.xlane.xlu0 %424
  %v426 = vmul.f32 %v425, %v241
  %v427 = vadd.f32 %v426, 1e-05
  %v428 = vrsqrt.pop %v427
  %v429 = vmul.f32 %v419, %v428
  %v430 = vmul.f32 %v420, %v428
  %v431 = vadd.f32 %v14, %v429
  %v432 = vadd.f32 %v15, %v430
  %433 = vst [vmem:[%s3] sm:$0xff] %v431
  %434 = vst [vmem:[%s3 + $0x8] sm:$0xff] %v432
  // Predicated region
  $region14: #{resblock_pallas.1} parent=0 // pred_check
    _
  $region15: #{resblock_pallas.1} parent=0 // pred_check_branch
    %436 = sbr.rel (0) target = $region17
  $region16: #{resblock_pallas.1} parent=0 // pred_region
    _
  $region17: #{resblock_pallas.1} parent=0 // pred_fallthru
    _
  // Predicated region
  $region18: #{resblock_pallas.1} parent=0 // pred_check
    _
  $region19: #{resblock_pallas.1} parent=0 // pred_check_branch
    %438 = sbr.rel (0) target = $region21
  $region20: #{resblock_pallas.1} parent=0 // pred_region
    _
  $region21: #{resblock_pallas.1} parent=0 // pred_fallthru
    _

</llo_original>
